<compile_context>
chip_gen: v6e
topology: v6e:2x2x1
jax: 0.10.0
libtpu: 0.0.40
codegen_flags: <defaults>
</compile_context>

<pallas_src>
import numpy as np

import jax
import jax.numpy as jnp
from jax.experimental import pallas as pl
from jax.experimental.pallas import tpu as pltpu


# --------------------------------------------------------------------------
# Trace-time constants (numpy)
# --------------------------------------------------------------------------
def _gaussian_taps_1d(kernel_size: int, sigma: float) -> np.ndarray:
    """Normalized 1-D Gaussian taps.

    PyTorch builds k2d = outer(g, g) / sum(k2d), which factorizes exactly as
    (g / sum(g)) x (g / sum(g)), so the separable form with these taps
    reproduces the depthwise 2-D weights.
    """
    mean = (kernel_size - 1) / 2.0
    idx = np.arange(kernel_size, dtype=np.float64)
    g = np.exp(-0.5 * ((idx - mean) / float(sigma)) ** 2)
    return g / g.sum()


def _reflect_index(i: int, n: int) -> int:
    """PyTorch 'reflect' (no edge repeat) index for i in [-(n-1), 2n-2]."""
    if i < 0:
        return -i
    if i >= n:
        return 2 * (n - 1) - i
    return i


def _reflect_conv_matrix(taps: np.ndarray, n: int) -> np.ndarray:
    """Dense n x n matrix A with (A @ v) == reflect-padded 'same' correlation of v."""
    k = len(taps)
    pad = k // 2
    a = np.zeros((n, n), dtype=np.float64)
    for i in range(n):
        for d in range(-pad, pad + 1):
            a[i, _reflect_index(i + d, n)] += taps[pad + d]
    return a


# --------------------------------------------------------------------------
# Generation-aware tile sizing
# --------------------------------------------------------------------------
def _vmem_capacity_bytes() -> int:
    """Physical VMEM per TensorCore; 64 MiB fallback (v7x-sized, safe everywhere)."""
    try:
        cap = int(pltpu.get_tpu_info().vmem_capacity_bytes)
        if cap > 0:
            return cap
    except Exception:
        pass
    return 64 * 1024 * 1024


def _divisors(n: int):
    return [d for d in range(1, n + 1) if n % d == 0]


def _pick_block_kron(nc: int, hw: int, itemsize: int, budget: int) -> int:
    """Rows per grid step for the flattened (nc, hw) @ (hw, hw) matmul path."""
    mat_bytes = 2 * hw * hw * 4                  # filter matrix (+ buffering slack)
    per_plane = hw * (4 * itemsize + 8)          # 2x-buffered in/out + f32 temps
    bmax = max(1, max(0, budget - mat_bytes) // per_plane)
    # 2-D block: second-minor block dim must be a multiple of 8 or the full axis.
    cands = [d for d in _divisors(nc) if d % 8 == 0 or d == nc] or [nc]
    fitting = [d for d in cands if d <= bmax]
    b = max(fitting) if fitting else min(cands)
    if nc // b < 2:                              # keep both v7x TensorCores busy
        par = [d for d in cands if d <= bmax and nc // d >= 2]
        if par:
            b = max(par)
    return b


def _pick_block_sep(nc: int, h: int, w: int, itemsize: int, budget: int) -> int:
    """Planes per grid step for the per-plane separable two-matmul path."""
    mat_bytes = 2 * (h * h + w * w) * 4
    per_plane = h * w * (4 * itemsize + 12)      # 2x-buffered in/out + ~3 f32 temps
    bmax = max(1, max(0, budget - mat_bytes) // per_plane)
    divs = _divisors(nc)
    fitting = [d for d in divs if d <= bmax]
    b = max(fitting) if fitting else 1
    if nc // b < 2:                              # >= 2 parallel steps when possible
        par = [d for d in divs if d <= bmax and nc // d >= 2]
        if par:
            b = max(par)
    return b


# --------------------------------------------------------------------------
# Kernels
# --------------------------------------------------------------------------
def _kron_kernel(m_ref, x_ref, o_ref):
    # x_ref: (b, H*W) flattened planes; m_ref: (H*W, H*W) = kron(A_H, A_W)^T.
    xt = x_ref[...].astype(jnp.float32)
    y = jnp.dot(xt, m_ref[...], preferred_element_type=jnp.float32)
    o_ref[...] = y.astype(o_ref.dtype)


def _separable_kernel(awt_ref, ah_ref, x_ref, o_ref):
    # x_ref/o_ref: (b, H, W); awt_ref: (W, W) = A_W^T; ah_ref: (H, H) = A_H.
    awt = awt_ref[...]
    ah = ah_ref[...]

    def body(i, carry):
        plane = x_ref[i].astype(jnp.float32)                            # (H, W)
        tmp = jnp.dot(plane, awt, preferred_element_type=jnp.float32)   # W pass
        out = jnp.dot(ah, tmp, preferred_element_type=jnp.float32)      # H pass
        o_ref[i] = out.astype(o_ref.dtype)
        return carry

    jax.lax.fori_loop(0, x_ref.shape[0], body, 0)


# --------------------------------------------------------------------------
# Wrapper
# --------------------------------------------------------------------------
def gaussian_smoothing(x: jax.Array, kernel_size: int, sigma: float) -> jax.Array:
    """Forward pass of GaussianSmoothing (dim=2, NCHW, reflect 'same' padding)."""
    if x.ndim != 4:
        raise ValueError("expected NCHW input (the dim=2 module variant)")
    if kernel_size % 2 != 1:
        raise ValueError("kernel_size must be odd for a same-size output")
    N, C, H, W = x.shape
    pad = kernel_size // 2
    if pad >= H or pad >= W:
        raise ValueError("reflect padding requires kernel_size // 2 < min(H, W)")

    taps = _gaussian_taps_1d(kernel_size, float(sigma))
    a_h = _reflect_conv_matrix(taps, H)
    a_w = _reflect_conv_matrix(taps, W)

    itemsize = jnp.dtype(x.dtype).itemsize
    capacity = _vmem_capacity_bytes()
    # ~30% of VMEM as per-step working-set budget (~19 MiB v7x, ~38 MiB v5e/v6e),
    # scoped limit at ~60% of capacity, capped at 64 MiB.
    budget = min(int(0.30 * capacity), 44 * 1024 * 1024)
    vmem_limit = min(int(0.60 * capacity), 64 * 1024 * 1024)
    compiler_params = pltpu.CompilerParams(
        dimension_semantics=("parallel",),
        vmem_limit_bytes=vmem_limit,
    )

    nc = N * C
    hw = H * W
    # Small planes (attention-map sizes): one lane-dense Kronecker matmul per step.
    use_kron = hw * hw * 4 <= 2 * 1024 * 1024

    if use_kron:
        m2d_t = jnp.asarray(np.kron(a_h, a_w).T, dtype=jnp.float32)     # (hw, hw)
        x2 = x.reshape(nc, hw)                                          # free bitcast
        b = _pick_block_kron(nc, hw, itemsize, budget)
        out2 = pl.pallas_call(
            _kron_kernel,
            out_shape=jax.ShapeDtypeStruct((nc, hw), x.dtype),
            grid_spec=pltpu.PrefetchScalarGridSpec(
                num_scalar_prefetch=0,
                grid=(nc // b,),
                in_specs=[
                    pl.BlockSpec((hw, hw), lambda i: (0, 0)),
                    pl.BlockSpec((b, hw), lambda i: (i, 0)),
                ],
                out_specs=pl.BlockSpec((b, hw), lambda i: (i, 0)),
            ),
            compiler_params=compiler_params,
        )(m2d_t, x2)
        return out2.reshape(N, C, H, W)

    # Larger planes: per-plane separable pair of 2-D matmuls, planes blocked
    # over the fused N*C axis.
    # TODO(synk): halo-tile H (and use a VPU tap loop) once a single plane no
    # longer fits the VMEM budget (full-resolution frames).
    awt = jnp.asarray(a_w.T, dtype=jnp.float32)                         # (W, W)
    ah = jnp.asarray(a_h, dtype=jnp.float32)                            # (H, H)
    x3 = x.reshape(nc, H, W)
    b = _pick_block_sep(nc, H, W, itemsize, budget)
    out3 = pl.pallas_call(
        _separable_kernel,
        out_shape=jax.ShapeDtypeStruct((nc, H, W), x.dtype),
        grid_spec=pltpu.PrefetchScalarGridSpec(
            num_scalar_prefetch=0,
            grid=(nc // b,),
            in_specs=[
                pl.BlockSpec((W, W), lambda i: (0, 0)),
                pl.BlockSpec((H, H), lambda i: (0, 0)),
                pl.BlockSpec((b, H, W), lambda i: (i, 0, 0)),
            ],
            out_specs=pl.BlockSpec((b, H, W), lambda i: (i, 0, 0)),
        ),
        compiler_params=compiler_params,
    )(awt, ah, x3)
    return out3.reshape(N, C, H, W)


# --------------------------------------------------------------------------
# Plain-JAX reference (independent computation path) + self-test
# --------------------------------------------------------------------------
def _reference(x, kernel_size, sigma):
    N, C, H, W = x.shape
    pad = kernel_size // 2
    t = jnp.asarray(_gaussian_taps_1d(kernel_size, float(sigma)), dtype=jnp.float32)
    k2d = t[:, None] * t[None, :]
    xp = jnp.pad(
        x.astype(jnp.float32),
        ((0, 0), (0, 0), (pad, pad), (pad, pad)),
        mode="reflect",
    )
    out = jnp.zeros((N, C, H, W), dtype=jnp.float32)
    for i in range(kernel_size):
        for j in range(kernel_size):
            out = out + k2d[i, j] * xp[:, :, i:i + H, j:j + W]
    return out.astype(x.dtype)


if __name__ == "__main__":
    channels = 4
    kernel_size = 3
    sigma = 0.5

    key = jax.random.PRNGKey(0)
    x = jax.random.normal(key, (2, channels, 16, 16), dtype=jnp.float32)

    out = gaussian_smoothing(x, kernel_size, sigma)
    out = jax.block_until_ready(out)

    ref = _reference(x, kernel_size, sigma)
    assert out.shape == (2, channels, 16, 16)
    assert jnp.allclose(out, ref, atol=1e-5, rtol=1e-5), float(
        jnp.max(jnp.abs(out.astype(jnp.float32) - ref.astype(jnp.float32)))
    )

    print("KERNEL_OK")
</pallas_src>

<mosaic_0001>
module attributes {stable_mosaic.version = 11 : i64} {
  func.func @_kron_kernel(%arg0: i32, %arg1: memref<256x256xf32, #tpu.memory_space<vmem>>, %arg2: memref<8x256xf32, #tpu.memory_space<vmem>>, %arg3: memref<8x256xf32, #tpu.memory_space<vmem>>) attributes {dimension_semantics = [#tpu.dimension_semantics<parallel>], iteration_bounds = array<i64: 1>, scalar_prefetch = 0 : i64, scratch_operands = 0 : i64, tpu.core_type = #tpu.core_type<tc>, window_params = [{pipeline_mode = #tpu.pipeline_mode<synchronous>, transform_indices = @transform_0, window_bounds = array<i64: 256, 256>}, {transform_indices = @transform_1, window_bounds = array<i64: 8, 256>}, {transform_indices = @transform_2, window_bounds = array<i64: 8, 256>}]} {
    %c0 = arith.constant 0 : index
    %c0_0 = arith.constant 0 : index
    %0 = vector.load %arg2[%c0, %c0_0] : memref<8x256xf32, #tpu.memory_space<vmem>>, vector<8x256xf32>
    %c0_1 = arith.constant 0 : index
    %c0_2 = arith.constant 0 : index
    %1 = vector.load %arg1[%c0_1, %c0_2] : memref<256x256xf32, #tpu.memory_space<vmem>>, vector<256x256xf32>
    %cst = arith.constant dense<0.000000e+00> : vector<8x256xf32>
    %2 = tpu.matmul %0, %1, %cst {dimension_numbers = #tpu.dot_dimension_numbers<[1], [0], [0], [1], [0, 0, 1, 1], [], []>} : vector<8x256xf32>, vector<256x256xf32>, vector<8x256xf32> -> vector<8x256xf32>
    %c0_3 = arith.constant 0 : index
    %c0_4 = arith.constant 0 : index
    %3 = vector.load %arg3[%c0_3, %c0_4] : memref<8x256xf32, #tpu.memory_space<vmem>>, vector<8x256xf32>
    tpu.vector_store %arg3[%c0_3, %c0_4], %2 {strides = array<i32>} : memref<8x256xf32, #tpu.memory_space<vmem>>, vector<8x256xf32>,
    return
  }
  func.func @transform_0(%arg0: i32) -> (i32, i32) {
    %c0_i32 = arith.constant 0 : i32
    %c0_i32_0 = arith.constant 0 : i32
    %c0_i32_1 = arith.constant 0 : i32
    return %c0_i32, %c0_i32_0 : i32, i32
  }
  func.func @transform_1(%arg0: i32) -> (i32, i32) {
    %c0_i32 = arith.constant 0 : i32
    %c0_i32_0 = arith.constant 0 : i32
    return %arg0, %c0_i32 : i32, i32
  }
  func.func @transform_2(%arg0: i32) -> (i32, i32) {
    %c0_i32 = arith.constant 0 : i32
    %c0_i32_0 = arith.constant 0 : i32
    return %arg0, %c0_i32 : i32, i32
  }
}

</mosaic_0001>

<llo_original>
// kernel: tpu_custom_call.1
$region0: #{tpu_custom_call.1}
  #allocation0 [shape = 'u32[]', space=smem, size = 0x4, offset = 0x4, fixed_abs, tag = 'smem constant byte address 0x4 - core index']
  #allocation1 [shape = 'u32[144,128]{1,0:T(1,128)}', space=vmem, size = 0x12000, scoped, tag = 'internal scratch']
  %s0 = inlined_call_operand.hbm [shape: f32[256,256], index: 0, kind: input, shape index: {}]
  %s1 = inlined_call_operand.hbm [shape: f32[8,256], index: 1, kind: input, shape index: {}]
  %s2 = inlined_call_operand.hbm [shape: f32[8,256], index: 2, kind: output, shape index: {}]
  %s3 = sld [smem:[#allocation0]]
  $region26: #{tpu_custom_call.1} parent=0
    _
  %s5 = ssub.s32 1, %s3
  %s6 = scalar_select 0, %s5, %s3
  $region1: #{tpu_custom_call.1} parent=0
    #allocation2 [shape = 'u8[262144]{0}', space=vmem, size = 0x40000, scoped, tag = 'input window, operand 0, single buffered']
    #allocation3 [shape = 's32[1]{0}', space=sflag, size = 0x4, scoped, tag = 'scoped memory for tpu_custom_call.1']
    #allocation4 [shape = 's32[1]{0}', space=sflag, size = 0x4, scoped, tag = 'scoped memory for tpu_custom_call.1']
    #allocation5 [shape = 'u8[8192]{0}', space=vmem, size = 0x2000, scoped, tag = 'input window, operand 1, single buffered']
    #allocation6 [shape = 's32[1]{0}', space=sflag, size = 0x4, scoped, tag = 'scoped memory for tpu_custom_call.1']
    #allocation7 [shape = 'u8[8192]{0}', space=vmem, size = 0x2000, scoped, tag = 'output window, operand 0, single buffered']
    %7 = vsyncpa [#allocation3], 0
    %8 = vsyncpa [#allocation6], 0
    %9 = vsyncpa [#allocation4], 0
    // Predicated region
    $region2: #{tpu_custom_call.1} parent=1 // pred_check
      _
    $region3: #{tpu_custom_call.1} parent=1 // pred_check_branch
      %11 = sbr.rel (0) target = $region5
    $region4: #{tpu_custom_call.1} parent=1 // pred_region
      %s13 = ssub.s32 8192, 8192
      %14 = vsyncadd [#allocation3], %s13
      %s15 = sshll.u32 [#allocation2], 4
      %s16 = int_to_ptr.vmem [resolvable:$true] %s15
      %21 = dma.hbm_to_vmem [thread:$0]  %s0, 8192, %s16, [#allocation3], 256, 256, 16
    $region5: #{tpu_custom_call.1} parent=1 // pred_fallthru
      _
    // Predicated region
    $region6: #{tpu_custom_call.1} parent=1 // pred_check
      _
    $region7: #{tpu_custom_call.1} parent=1 // pred_check_branch
      %23 = sbr.rel (0) target = $region9
    $region8: #{tpu_custom_call.1} parent=1 // pred_region
      %s25 = ssub.s32 256, 256
      %26 = vsyncadd [#allocation6], %s25
      %s28 = sshll.u32 [#allocation5], 4
      %s29 = int_to_ptr.vmem [resolvable:$true] %s28
      %31 = dma.hbm_to_vmem [thread:$0]  %s1, 256, %s29, [#allocation6]
    $region9: #{tpu_custom_call.1} parent=1 // pred_fallthru
      _
    // Predicated region
    $region10: #{tpu_custom_call.1} parent=1 // pred_check
      _
    $region11: #{tpu_custom_call.1} parent=1 // pred_check_branch
      %33 = sbr.rel (0) target = $region13
    $region12: #{tpu_custom_call.1} parent=1 // pred_region
      %34 = dma.done [#allocation3], 8192
    $region13: #{tpu_custom_call.1} parent=1 // pred_fallthru
      _
    // Predicated region
    $region14: #{tpu_custom_call.1} parent=1 // pred_check
      _
    $region15: #{tpu_custom_call.1} parent=1 // pred_check_branch
      %36 = sbr.rel (0) target = $region17
    $region16: #{tpu_custom_call.1} parent=1 // pred_region
      %37 = dma.done [#allocation6], 256
    $region17: #{tpu_custom_call.1} parent=1 // pred_fallthru
      _
    %v38 = vld [vmem:[#allocation5] sm:$0xff]
    %v39 = vld [vmem:[#allocation5 + $0x8] sm:$0xff]
    %v40 = vld [vmem:[#allocation2] sm:$0xff]
    %v41 = vld [vmem:[#allocation2 + $0x8] sm:$0xff]
    %v42 = vld [vmem:[#allocation2 + $0x10] sm:$0xff]
    %v43 = vld [vmem:[#allocation2 + $0x18] sm:$0xff]
    %v44 = vld [vmem:[#allocation2 + $0x20] sm:$0xff]
    %v45 = vld [vmem:[#allocation2 + $0x28] sm:$0xff]
    %v46 = vld [vmem:[#allocation2 + $0x30] sm:$0xff]
    %v47 = vld [vmem:[#allocation2 + $0x38] sm:$0xff]
    %v48 = vld [vmem:[#allocation2 + $0x40] sm:$0xff]
    %v49 = vld [vmem:[#allocation2 + $0x48] sm:$0xff]
    %v50 = vld [vmem:[#allocation2 + $0x50] sm:$0xff]
    %v51 = vld [vmem:[#allocation2 + $0x58] sm:$0xff]
    %v52 = vld [vmem:[#allocation2 + $0x60] sm:$0xff]
    %v53 = vld [vmem:[#allocation2 + $0x68] sm:$0xff]
    %v54 = vld [vmem:[#allocation2 + $0x70] sm:$0xff]
    %v55 = vld [vmem:[#allocation2 + $0x78] sm:$0xff]
    %v56 = vld [vmem:[#allocation2 + $0x80] sm:$0xff]
    %v57 = vld [vmem:[#allocation2 + $0x88] sm:$0xff]
    %v58 = vld [vmem:[#allocation2 + $0x90] sm:$0xff]
    %v59 = vld [vmem:[#allocation2 + $0x98] sm:$0xff]
    %v60 = vld [vmem:[#allocation2 + $0xa0] sm:$0xff]
    %v61 = vld [vmem:[#allocation2 + $0xa8] sm:$0xff]
    %v62 = vld [vmem:[#allocation2 + $0xb0] sm:$0xff]
    %v63 = vld [vmem:[#allocation2 + $0xb8] sm:$0xff]
    %v64 = vld [vmem:[#allocation2 + $0xc0] sm:$0xff]
    %v65 = vld [vmem:[#allocation2 + $0xc8] sm:$0xff]
    %v66 = vld [vmem:[#allocation2 + $0xd0] sm:$0xff]
    %v67 = vld [vmem:[#allocation2 + $0xd8] sm:$0xff]
    %v68 = vld [vmem:[#allocation2 + $0xe0] sm:$0xff]
    %v69 = vld [vmem:[#allocation2 + $0xe8] sm:$0xff]
    %v70 = vld [vmem:[#allocation2 + $0xf0] sm:$0xff]
    %v71 = vld [vmem:[#allocation2 + $0xf8] sm:$0xff]
    %v72 = vld [vmem:[#allocation2 + $0x100] sm:$0xff]
    %v73 = vld [vmem:[#allocation2 + $0x108] sm:$0xff]
    %v74 = vld [vmem:[#allocation2 + $0x110] sm:$0xff]
    %v75 = vld [vmem:[#allocation2 + $0x118] sm:$0xff]
    %v76 = vld [vmem:[#allocation2 + $0x120] sm:$0xff]
    %v77 = vld [vmem:[#allocation2 + $0x128] sm:$0xff]
    %v78 = vld [vmem:[#allocation2 + $0x130] sm:$0xff]
    %v79 = vld [vmem:[#allocation2 + $0x138] sm:$0xff]
    %v80 = vld [vmem:[#allocation2 + $0x140] sm:$0xff]
    %v81 = vld [vmem:[#allocation2 + $0x148] sm:$0xff]
    %v82 = vld [vmem:[#allocation2 + $0x150] sm:$0xff]
    %v83 = vld [vmem:[#allocation2 + $0x158] sm:$0xff]
    %v84 = vld [vmem:[#allocation2 + $0x160] sm:$0xff]
    %v85 = vld [vmem:[#allocation2 + $0x168] sm:$0xff]
    %v86 = vld [vmem:[#allocation2 + $0x170] sm:$0xff]
    %v87 = vld [vmem:[#allocation2 + $0x178] sm:$0xff]
    %v88 = vld [vmem:[#allocation2 + $0x180] sm:$0xff]
    %v89 = vld [vmem:[#allocation2 + $0x188] sm:$0xff]
    %v90 = vld [vmem:[#allocation2 + $0x190] sm:$0xff]
    %v91 = vld [vmem:[#allocation2 + $0x198] sm:$0xff]
    %v92 = vld [vmem:[#allocation2 + $0x1a0] sm:$0xff]
    %v93 = vld [vmem:[#allocation2 + $0x1a8] sm:$0xff]
    %v94 = vld [vmem:[#allocation2 + $0x1b0] sm:$0xff]
    %v95 = vld [vmem:[#allocation2 + $0x1b8] sm:$0xff]
    %v96 = vld [vmem:[#allocation2 + $0x1c0] sm:$0xff]
    %v97 = vld [vmem:[#allocation2 + $0x1c8] sm:$0xff]
    %v98 = vld [vmem:[#allocation2 + $0x1d0] sm:$0xff]
    %v99 = vld [vmem:[#allocation2 + $0x1d8] sm:$0xff]
    %v100 = vld [vmem:[#allocation2 + $0x1e0] sm:$0xff]
    %v101 = vld [vmem:[#allocation2 + $0x1e8] sm:$0xff]
    %v102 = vld [vmem:[#allocation2 + $0x1f0] sm:$0xff]
    %v103 = vld [vmem:[#allocation2 + $0x1f8] sm:$0xff]
    %104 = vmatprep.subr.mxu0 %v71
    %105 = vmatpush1.msra.mxu0 %v70
    %106 = vmatprep.subr.mxu0 %v69
    %107 = vmatpush1.msra.mxu0 %v68
    %108 = vmatprep.subr.mxu0 %v67
    %109 = vmatpush1.msra.mxu0 %v66
    %110 = vmatprep.subr.mxu0 %v65
    %111 = vmatpush1.msra.mxu0 %v64
    %112 = vmatprep.subr.mxu0 %v63
    %113 = vmatpush1.msra.mxu0 %v62
    %114 = vmatprep.subr.mxu0 %v61
    %115 = vmatpush1.msra.mxu0 %v60
    %116 = vmatprep.subr.mxu0 %v59
    %117 = vmatpush1.msra.mxu0 %v58
    %118 = vmatprep.subr.mxu0 %v57
    %119 = vmatpush1.msra.mxu0 %v56
    %120 = vmatprep.subr.mxu0 %v55
    %121 = vmatpush1.msra.mxu0 %v54
    %122 = vmatprep.subr.mxu0 %v53
    %123 = vmatpush1.msra.mxu0 %v52
    %124 = vmatprep.subr.mxu0 %v51
    %125 = vmatpush1.msra.mxu0 %v50
    %126 = vmatprep.subr.mxu0 %v49
    %127 = vmatpush1.msra.mxu0 %v48
    %128 = vmatprep.subr.mxu0 %v47
    %129 = vmatpush1.msra.mxu0 %v46
    %130 = vmatprep.subr.mxu0 %v45
    %131 = vmatpush1.msra.mxu0 %v44
    %132 = vmatprep.subr.mxu0 %v43
    %133 = vmatpush1.msra.mxu0 %v42
    %134 = vmatprep.subr.mxu0 %v41
    %135 = vmatpush1.msra.mxu0 %v40
    %136 = vmatprep.subr.mxu0 %v103
    %137 = vmatpush2.msra.mxu0 %v102
    %138 = vmatprep.subr.mxu0 %v101
    %139 = vmatpush2.msra.mxu0 %v100
    %140 = vmatprep.subr.mxu0 %v99
    %141 = vmatpush2.msra.mxu0 %v98
    %142 = vmatprep.subr.mxu0 %v97
    %143 = vmatpush2.msra.mxu0 %v96
    %144 = vmatprep.subr.mxu0 %v95
    %145 = vmatpush2.msra.mxu0 %v94
    %146 = vmatprep.subr.mxu0 %v93
    %147 = vmatpush2.msra.mxu0 %v92
    %148 = vmatprep.subr.mxu0 %v91
    %149 = vmatpush2.msra.mxu0 %v90
    %150 = vmatprep.subr.mxu0 %v89
    %151 = vmatpush2.msra.mxu0 %v88
    %152 = vmatprep.subr.mxu0 %v87
    %153 = vmatpush2.msra.mxu0 %v86
    %154 = vmatprep.subr.mxu0 %v85
    %155 = vmatpush2.msra.mxu0 %v84
    %156 = vmatprep.subr.mxu0 %v83
    %157 = vmatpush2.msra.mxu0 %v82
    %158 = vmatprep.subr.mxu0 %v81
    %159 = vmatpush2.msra.mxu0 %v80
    %160 = vmatprep.subr.mxu0 %v79
    %161 = vmatpush2.msra.mxu0 %v78
    %162 = vmatprep.subr.mxu0 %v77
    %163 = vmatpush2.msra.mxu0 %v76
    %164 = vmatprep.subr.mxu0 %v75
    %165 = vmatpush2.msra.mxu0 %v74
    %166 = vmatprep.subr.mxu0 %v73
    %167 = vmatpush2.msra.mxu0 %v72
    %168 = vmatprep.mubr.f32.mxu0 %v39
    %169 = vmatmul.mubr.f32.gmra.mxu0 %v38
    %v170 = vpop.f32.mrf.mxu0
    %v171 = vadd.f32 0.0, %v170
    %v172 = vpop.f32.mrf.mxu0
    %v173 = vadd.f32 0.0, %v172
    %174 = vdwg.mxu0
    %175 = vst [vmem:[#allocation7] sm:$0xff] %v171
    %176 = vst [vmem:[#allocation7 + $0x8] sm:$0xff] %v173
    // Predicated region
    $region18: #{tpu_custom_call.1} parent=1 // pred_check
      _
    $region19: #{tpu_custom_call.1} parent=1 // pred_check_branch
      %178 = sbr.rel (0) target = $region21
    $region20: #{tpu_custom_call.1} parent=1 // pred_region
      %s180 = ssub.s32 256, 256
      %181 = vsyncadd [#allocation4], %s180
      %s183 = sshll.u32 [#allocation7], 4
      %s184 = int_to_ptr.vmem [resolvable:$true] %s183
      %186 = dma.vmem_to_hbm [thread:$0]  %s184, 256, %s2, [#allocation4]
    $region21: #{tpu_custom_call.1} parent=1 // pred_fallthru
      _
    // Predicated region
    $region22: #{tpu_custom_call.1} parent=1 // pred_check
      _
    $region23: #{tpu_custom_call.1} parent=1 // pred_check_branch
      %188 = sbr.rel (0) target = $region25
    $region24: #{tpu_custom_call.1} parent=1 // pred_region
      %189 = dma.done [#allocation4], 256
    $region25: #{tpu_custom_call.1} parent=1 // pred_fallthru
      _
    %190 = vsyncpa [#allocation3], 1
    %191 = vsyncpa [#allocation6], 1
    %192 = vsyncpa [#allocation4], 1

</llo_original>
